<compile_context>
chip_gen: v5e
topology: v5e:2x2
jax: 0.10.0
libtpu: 0.0.40
codegen_flags: <defaults>
</compile_context>

<pallas_src>
import functools

import jax
import jax.numpy as jnp
from jax import lax
from jax.experimental import pallas as pl
from jax.experimental.pallas import tpu as pltpu


def _zdisc_kernel(x_ref, w1_ref, b1_ref, w2_ref, b2_ref, w3_ref, b3_ref, o_ref,
                  *, mxu_dtype, act_dtype, approx_sigmoid):
    # x tile streamed as (tb, Z); cast to the MXU dtype in-kernel (VPU, no host pass).
    x = x_ref[...].astype(mxu_dtype)

    # Layer 1: contract over Z on the MXU, keeping batch on the lane axis:
    #   (D, Z) . (tb, Z) -> (D, tb), f32 accumulation.
    h = lax.dot_general(w1_ref[...], x,
                        dimension_numbers=(((1,), (1,)), ((), ())),
                        preferred_element_type=jnp.float32)
    h = h.astype(act_dtype) + b1_ref[...]      # (D, 1) bias broadcast over lanes
    h = jnp.maximum(h, 0.2 * h)                # leaky_relu(0.2): vmul + vmax

    # Layer 2: (D, D) @ (D, tb) -> (D, tb).
    h = jnp.dot(w2_ref[...], h.astype(mxu_dtype),
                preferred_element_type=jnp.float32)
    h = h.astype(act_dtype) + b2_ref[...]
    h = jnp.maximum(h, 0.2 * h)

    # Layer 3: d -> 1 as VPU multiply + sublane (XLU) reduction, f32 accumulation.
    logit = jnp.sum((h * w3_ref[...]).astype(jnp.float32),
                    axis=0, keepdims=True) + b3_ref[0]        # (1, tb) f32

    # Sigmoid: exp on EUP; approximate reciprocal only on the fast path.
    if approx_sigmoid:
        sig = pl.reciprocal(1.0 + jnp.exp(-logit), approx=True)
    else:
        sig = 1.0 / (1.0 + jnp.exp(-logit))
    o_ref[0] = sig.astype(o_ref.dtype)         # lane-dense (1, tb) unmasked store


def _round_up(n, m):
    return ((n + m - 1) // m) * m


def z_discriminator_forward(x, params, *, mxu_dtype=jnp.bfloat16, act_dtype=None,
                            approx_sigmoid=None, n_tile_target=2, max_block_b=4096):
    """Forward pass of ZDiscriminator.

    x: (B, z_size) float32.
    params: w1 (d, z), b1 (d, 1), w2 (d, d), b2 (d, 1), w3 (d, 1), b3 (1,).
    Returns (B, 1) float32 sigmoid outputs.
    """
    B, Z = x.shape
    D = params["w1"].shape[0]

    mxu_is_bf16 = jnp.dtype(mxu_dtype) == jnp.dtype(jnp.bfloat16)
    if act_dtype is None:
        act_dtype = jnp.bfloat16 if mxu_is_bf16 else jnp.float32
    if approx_sigmoid is None:
        approx_sigmoid = jnp.dtype(act_dtype) == jnp.dtype(jnp.bfloat16)

    # Tile the batch on the lane axis: derive tb from B (bounded pad waste), cap it,
    # and aim for >= n_tile_target tiles so the parallel axis can use both v7x cores.
    tb = _round_up(max(pl.cdiv(B, max(n_tile_target, 1)), 1), 128)
    tb = min(tb, _round_up(max_block_b, 128))
    n_tiles = pl.cdiv(B, tb)
    b_pad = n_tiles * tb

    if b_pad != B:
        x = jnp.pad(x, ((0, b_pad - B), (0, 0)))   # only pad; no transpose / cast pass

    w1 = params["w1"].astype(mxu_dtype)             # MXU operands
    w2 = params["w2"].astype(mxu_dtype)
    b1 = params["b1"].astype(act_dtype)             # post-matmul elementwise dtype
    b2 = params["b2"].astype(act_dtype)
    w3 = params["w3"].astype(act_dtype)             # VPU multiply weight (d, 1)
    b3 = params["b3"].astype(jnp.float32).reshape((1,))

    mxu_sz = jnp.dtype(mxu_dtype).itemsize
    act_sz = jnp.dtype(act_dtype).itemsize
    cost = pl.CostEstimate(
        flops=2 * b_pad * (Z * D + D * D + D),
        transcendentals=b_pad,
        bytes_accessed=(b_pad * Z * x.dtype.itemsize      # x
                        + (Z * D + D * D) * mxu_sz        # w1, w2
                        + 3 * D * act_sz + 4               # b1, b2, w3, b3
                        + b_pad * 4),                      # output
    )

    kernel = functools.partial(_zdisc_kernel, mxu_dtype=mxu_dtype,
                               act_dtype=act_dtype, approx_sigmoid=approx_sigmoid)

    out = pl.pallas_call(
        kernel,
        out_shape=jax.ShapeDtypeStruct((n_tiles, 1, tb), jnp.float32),
        grid=(n_tiles,),
        in_specs=[
            pl.BlockSpec((tb, Z), lambda i: (i, 0)),            # x tile (pipelined)
            pl.BlockSpec((D, Z), lambda i: (0, 0)),             # w1 (resident)
            pl.BlockSpec((D, 1), lambda i: (0, 0)),             # b1 (resident)
            pl.BlockSpec((D, D), lambda i: (0, 0)),             # w2 (resident)
            pl.BlockSpec((D, 1), lambda i: (0, 0)),             # b2 (resident)
            pl.BlockSpec((D, 1), lambda i: (0, 0)),             # w3 column (resident)
            pl.BlockSpec(memory_space=pltpu.MemorySpace.SMEM),  # b3 scalar in SMEM
        ],
        out_specs=pl.BlockSpec((1, 1, tb), lambda i: (i, 0, 0)),
        compiler_params=pltpu.CompilerParams(
            dimension_semantics=("parallel",),
            vmem_limit_bytes=32 << 20,
        ),
        cost_estimate=cost,
    )(x, w1, b1, w2, b2, w3, b3)

    # Lane-dense (n_tiles, 1, tb) slab back to the module's (B, 1) layout.
    return out.reshape(-1)[:B].reshape(B, 1)


def init_params(key, z_size, d=128, mean=0.0, std=0.02):
    """Mimics ZDiscriminator.weight_init(mean, std): weights ~ N(mean, std), biases 0.
    Weight layout: w1/w2 in PyTorch (out, in); w3 stored as the (d, 1) column."""
    k1, k2, k3 = jax.random.split(key, 3)
    return {
        "w1": mean + std * jax.random.normal(k1, (d, z_size), jnp.float32),
        "b1": jnp.zeros((d, 1), jnp.float32),
        "w2": mean + std * jax.random.normal(k2, (d, d), jnp.float32),
        "b2": jnp.zeros((d, 1), jnp.float32),
        "w3": mean + std * jax.random.normal(k3, (d, 1), jnp.float32),
        "b3": jnp.zeros((1,), jnp.float32),
    }


def _reference(x, p):
    lrelu = lambda v: jnp.where(v >= 0, v, 0.2 * v)
    h = lrelu(x @ p["w1"].T + p["b1"][:, 0])
    h = lrelu(h @ p["w2"].T + p["b2"][:, 0])
    return jax.nn.sigmoid(h @ p["w3"] + p["b3"])


if __name__ == "__main__":
    key = jax.random.PRNGKey(0)
    k_x, k_p, k_x2 = jax.random.split(key, 3)

    B, Z, D = 8, 32, 128
    x = jax.random.normal(k_x, (B, Z), jnp.float32)
    params = init_params(k_p, Z, D)
    ref = _reference(x, params)

    # Exact path: f32 MXU operands, f32 elementwise, exact sigmoid.
    out_f32 = jax.block_until_ready(
        z_discriminator_forward(x, params, mxu_dtype=jnp.float32))
    assert out_f32.shape == (B, 1), out_f32.shape
    assert jnp.allclose(out_f32, ref, atol=1e-4, rtol=1e-4), \
        float(jnp.max(jnp.abs(out_f32 - ref)))

    # Fast path (default): bf16 MXU + bf16 post-matmul elementwise, approx reciprocal.
    out_bf16 = jax.block_until_ready(z_discriminator_forward(x, params))
    assert out_bf16.shape == (B, 1), out_bf16.shape
    assert jnp.allclose(out_bf16, ref, atol=2e-2, rtol=2e-2), \
        float(jnp.max(jnp.abs(out_bf16 - ref)))

    # Multi-tile + padding path (n_tiles = 2, B not a multiple of the tile).
    B2 = 300
    x2 = jax.random.normal(k_x2, (B2, Z), jnp.float32)
    ref2 = _reference(x2, params)
    out2 = jax.block_until_ready(z_discriminator_forward(x2, params))
    assert out2.shape == (B2, 1), out2.shape
    assert jnp.allclose(out2, ref2, atol=2e-2, rtol=2e-2), \
        float(jnp.max(jnp.abs(out2 - ref2)))

    print("KERNEL_OK")
</pallas_src>

<mosaic_0001>
module attributes {stable_mosaic.version = 11 : i64} {
  func.func @_zdisc_kernel(%arg0: i32, %arg1: memref<128x32xf32, #tpu.memory_space<vmem>>, %arg2: memref<128x32xf32, #tpu.memory_space<vmem>>, %arg3: memref<128x1xf32, #tpu.memory_space<vmem>>, %arg4: memref<128x128xf32, #tpu.memory_space<vmem>>, %arg5: memref<128x1xf32, #tpu.memory_space<vmem>>, %arg6: memref<128x1xf32, #tpu.memory_space<vmem>>, %arg7: memref<1xf32, #tpu.memory_space<smem>>, %arg8: memref<1x1x128xf32, #tpu.memory_space<vmem>>) attributes {dimension_semantics = [#tpu.dimension_semantics<parallel>], iteration_bounds = array<i64: 1>, scalar_prefetch = 0 : i64, scratch_operands = 0 : i64, tpu.core_type = #tpu.core_type<tc>, window_params = [{transform_indices = @transform_0, window_bounds = array<i64: 128, 32>}, {pipeline_mode = #tpu.pipeline_mode<synchronous>, transform_indices = @transform_1, window_bounds = array<i64: 128, 32>}, {pipeline_mode = #tpu.pipeline_mode<synchronous>, transform_indices = @transform_2, window_bounds = array<i64: 128, 1>}, {pipeline_mode = #tpu.pipeline_mode<synchronous>, transform_indices = @transform_3, window_bounds = array<i64: 128, 128>}, {pipeline_mode = #tpu.pipeline_mode<synchronous>, transform_indices = @transform_4, window_bounds = array<i64: 128, 1>}, {pipeline_mode = #tpu.pipeline_mode<synchronous>, transform_indices = @transform_5, window_bounds = array<i64: 128, 1>}, {transform_indices = @transform_6, window_bounds = array<i64: 1>}, {transform_indices = @transform_7, window_bounds = array<i64: 1, 1, 128>}]} {
    %c0 = arith.constant 0 : index
    %c0_0 = arith.constant 0 : index
    %0 = vector.load %arg1[%c0, %c0_0] : memref<128x32xf32, #tpu.memory_space<vmem>>, vector<128x32xf32>
    %c0_1 = arith.constant 0 : index
    %c0_2 = arith.constant 0 : index
    %1 = vector.load %arg2[%c0_1, %c0_2] : memref<128x32xf32, #tpu.memory_space<vmem>>, vector<128x32xf32>
    %cst = arith.constant dense<0.000000e+00> : vector<128x128xf32>
    %2 = tpu.matmul %1, %0, %cst {dimension_numbers = #tpu.dot_dimension_numbers<[1], [1], [0], [0], [0, 0, 1, 0], [], []>} : vector<128x32xf32>, vector<128x32xf32>, vector<128x128xf32> -> vector<128x128xf32>
    %c0_3 = arith.constant 0 : index
    %c0_4 = arith.constant 0 : index
    %3 = vector.load %arg3[%c0_3, %c0_4] : memref<128x1xf32, #tpu.memory_space<vmem>>, vector<128x1xf32>
    %4 = vector.broadcast %3 : vector<128x1xf32> to vector<128x128xf32>
    %5 = arith.addf %2, %4 : vector<128x128xf32>
    %cst_5 = arith.constant 2.000000e-01 : f32
    %6 = vector.broadcast %cst_5 : f32 to vector<128x128xf32>
    %7 = arith.mulf %6, %5 : vector<128x128xf32>
    %8 = arith.maximumf %5, %7 : vector<128x128xf32>
    %c0_6 = arith.constant 0 : index
    %c0_7 = arith.constant 0 : index
    %9 = vector.load %arg4[%c0_6, %c0_7] : memref<128x128xf32, #tpu.memory_space<vmem>>, vector<128x128xf32>
    %cst_8 = arith.constant dense<0.000000e+00> : vector<128x128xf32>
    %10 = tpu.matmul %9, %8, %cst_8 {dimension_numbers = #tpu.dot_dimension_numbers<[1], [0], [0], [1], [0, 0, 1, 1], [], []>} : vector<128x128xf32>, vector<128x128xf32>, vector<128x128xf32> -> vector<128x128xf32>
    %c0_9 = arith.constant 0 : index
    %c0_10 = arith.constant 0 : index
    %11 = vector.load %arg5[%c0_9, %c0_10] : memref<128x1xf32, #tpu.memory_space<vmem>>, vector<128x1xf32>
    %12 = vector.broadcast %11 : vector<128x1xf32> to vector<128x128xf32>
    %13 = arith.addf %10, %12 : vector<128x128xf32>
    %cst_11 = arith.constant 2.000000e-01 : f32
    %14 = vector.broadcast %cst_11 : f32 to vector<128x128xf32>
    %15 = arith.mulf %14, %13 : vector<128x128xf32>
    %16 = arith.maximumf %13, %15 : vector<128x128xf32>
    %c0_12 = arith.constant 0 : index
    %c0_13 = arith.constant 0 : index
    %17 = vector.load %arg6[%c0_12, %c0_13] : memref<128x1xf32, #tpu.memory_space<vmem>>, vector<128x1xf32>
    %18 = vector.broadcast %17 : vector<128x1xf32> to vector<128x128xf32>
    %19 = arith.mulf %16, %18 : vector<128x128xf32>
    %cst_14 = arith.constant dense<0.000000e+00> : vector<128xf32>
    %20 = vector.multi_reduction <add>, %19, %cst_14 [0] : vector<128x128xf32> to vector<128xf32>
    %21 = vector.shape_cast %20 : vector<128xf32> to vector<1x128xf32>
    %c0_15 = arith.constant 0 : index
    %22 = memref.load %arg7[%c0_15] : memref<1xf32, #tpu.memory_space<smem>>
    %23 = vector.broadcast %22 : f32 to vector<1x128xf32>
    %24 = arith.addf %21, %23 : vector<1x128xf32>
    %cst_16 = arith.constant 0.000000e+00 : f32
    %25 = vector.broadcast %cst_16 : f32 to vector<1x128xf32>
    %26 = arith.subf %25, %24 : vector<1x128xf32>
    %27 = math.exp %26 : vector<1x128xf32>
    %cst_17 = arith.constant 1.000000e+00 : f32
    %28 = vector.broadcast %cst_17 : f32 to vector<1x128xf32>
    %29 = arith.addf %28, %27 : vector<1x128xf32>
    %cst_18 = arith.constant 1.000000e+00 : f32
    %30 = vector.broadcast %cst_18 : f32 to vector<1x128xf32>
    %31 = arith.divf %30, %29 : vector<1x128xf32>
    %c0_19 = arith.constant 0 : index
    %c0_20 = arith.constant 0 : index
    %c0_21 = arith.constant 0 : index
    %32 = vector.load %arg8[%c0_19, %c0_20, %c0_21] : memref<1x1x128xf32, #tpu.memory_space<vmem>>, vector<1x1x128xf32>
    %33 = vector.shape_cast %32 : vector<1x1x128xf32> to vector<1x128xf32>
    %34 = vector.shape_cast %31 : vector<1x128xf32> to vector<1x1x128xf32>
    tpu.vector_store %arg8[%c0_19, %c0_20, %c0_21], %34 {strides = array<i32>} : memref<1x1x128xf32, #tpu.memory_space<vmem>>, vector<1x1x128xf32>,
    return
  }
  func.func @transform_0(%arg0: i32) -> (i32, i32) {
    %c0_i32 = arith.constant 0 : i32
    %c0_i32_0 = arith.constant 0 : i32
    return %arg0, %c0_i32 : i32, i32
  }
  func.func @transform_1(%arg0: i32) -> (i32, i32) {
    %c0_i32 = arith.constant 0 : i32
    %c0_i32_0 = arith.constant 0 : i32
    %c0_i32_1 = arith.constant 0 : i32
    return %c0_i32, %c0_i32_0 : i32, i32
  }
  func.func @transform_2(%arg0: i32) -> (i32, i32) {
    %c0_i32 = arith.constant 0 : i32
    %c0_i32_0 = arith.constant 0 : i32
    %c0_i32_1 = arith.constant 0 : i32
    return %c0_i32, %c0_i32_0 : i32, i32
  }
  func.func @transform_3(%arg0: i32) -> (i32, i32) {
    %c0_i32 = arith.constant 0 : i32
    %c0_i32_0 = arith.constant 0 : i32
    %c0_i32_1 = arith.constant 0 : i32
    return %c0_i32, %c0_i32_0 : i32, i32
  }
  func.func @transform_4(%arg0: i32) -> (i32, i32) {
    %c0_i32 = arith.constant 0 : i32
    %c0_i32_0 = arith.constant 0 : i32
    %c0_i32_1 = arith.constant 0 : i32
    return %c0_i32, %c0_i32_0 : i32, i32
  }
  func.func @transform_5(%arg0: i32) -> (i32, i32) {
    %c0_i32 = arith.constant 0 : i32
    %c0_i32_0 = arith.constant 0 : i32
    %c0_i32_1 = arith.constant 0 : i32
    return %c0_i32, %c0_i32_0 : i32, i32
  }
  func.func @transform_6(%arg0: i32) -> i32 {
    %c0_i32 = arith.constant 0 : i32
    %c0_i32_0 = arith.constant 0 : i32
    return %c0_i32 : i32
  }
  func.func @transform_7(%arg0: i32) -> (i32, i32, i32) {
    %c0_i32 = arith.constant 0 : i32
    %c0_i32_0 = arith.constant 0 : i32
    %c0_i32_1 = arith.constant 0 : i32
    return %arg0, %c0_i32, %c0_i32_0 : i32, i32, i32
  }
}

</mosaic_0001>

<llo_original>
// kernel: tpu_custom_call.1
$region0: #{tpu_custom_call.1}
  #allocation0 [shape = 'u32[]', space=smem, size = 0x4, offset = 0x4, fixed_abs, tag = 'smem constant byte address 0x4 - core index']
  #allocation1 [shape = 'u32[72,128]{1,0:T(1,128)}', space=vmem, size = 0x9000, scoped, tag = 'internal scratch']
  #allocation2 [shape = 'f32[1]{0:T(128)S(6)}', space=smem, size = 0x200, scoped, tag = 'scoped memory for tpu_custom_call.1']
  %s0 = inlined_call_operand.vmem [shape: f32[128,32], index: 0, kind: input, shape index: {}]
  %s1 = inlined_call_operand.vmem [shape: f32[128,32], index: 1, kind: input, shape index: {}]
  %s2 = inlined_call_operand.vmem [shape: f32[128,1], index: 2, kind: input, shape index: {}]
  %s3 = inlined_call_operand.vmem [shape: f32[128,128], index: 3, kind: input, shape index: {}]
  %s4 = inlined_call_operand.vmem [shape: f32[128,1], index: 4, kind: input, shape index: {}]
  %s5 = inlined_call_operand.vmem [shape: f32[128,1], index: 5, kind: input, shape index: {}]
  %s6 = inlined_call_operand.<no memory space> [shape: f32[1], index: 6, kind: input, shape index: {}]
  %s7 = inlined_call_operand.hbm [shape: f32[1,1,128], index: 7, kind: output, shape index: {}]
  %s8 = sld [smem:[#allocation0]]
  $region38: #{tpu_custom_call.1} parent=0
    _
  %s10 = ssub.s32 1, %s8
  %s11 = scalar_select 0, %s10, %s8
  %12 = sst [smem:[#allocation2]] %s6
  $region1: #{tpu_custom_call.1} parent=0
    #allocation3 [shape = 'u8[512]{0}', space=vmem, size = 0x400, scoped, tag = 'output window, operand 0, single buffered']
    #allocation4 [shape = 's32[1]{0}', space=sflag, size = 0x4, scoped, tag = 'scoped memory for tpu_custom_call.1']
    %13 = vsyncpa [#allocation4], 0
    // Predicated region
    $region2: #{tpu_custom_call.1} parent=1 // pred_check
      _
    $region3: #{tpu_custom_call.1} parent=1 // pred_check_branch
      %15 = sbr.rel (0) target = $region5
    $region4: #{tpu_custom_call.1} parent=1 // pred_region
      _
    $region5: #{tpu_custom_call.1} parent=1 // pred_fallthru
      _
    // Predicated region
    $region6: #{tpu_custom_call.1} parent=1 // pred_check
      _
    $region7: #{tpu_custom_call.1} parent=1 // pred_check_branch
      %17 = sbr.rel (0) target = $region9
    $region8: #{tpu_custom_call.1} parent=1 // pred_region
      _
    $region9: #{tpu_custom_call.1} parent=1 // pred_fallthru
      _
    // Predicated region
    $region10: #{tpu_custom_call.1} parent=1 // pred_check
      _
    $region11: #{tpu_custom_call.1} parent=1 // pred_check_branch
      %19 = sbr.rel (0) target = $region13
    $region12: #{tpu_custom_call.1} parent=1 // pred_region
      _
    $region13: #{tpu_custom_call.1} parent=1 // pred_fallthru
      _
    // Predicated region
    $region14: #{tpu_custom_call.1} parent=1 // pred_check
      _
    $region15: #{tpu_custom_call.1} parent=1 // pred_check_branch
      %21 = sbr.rel (0) target = $region17
    $region16: #{tpu_custom_call.1} parent=1 // pred_region
      _
    $region17: #{tpu_custom_call.1} parent=1 // pred_fallthru
      _
    // Predicated region
    $region18: #{tpu_custom_call.1} parent=1 // pred_check
      _
    $region19: #{tpu_custom_call.1} parent=1 // pred_check_branch
      %23 = sbr.rel (0) target = $region21
    $region20: #{tpu_custom_call.1} parent=1 // pred_region
      _
    $region21: #{tpu_custom_call.1} parent=1 // pred_fallthru
      _
    // Predicated region
    $region22: #{tpu_custom_call.1} parent=1 // pred_check
      _
    $region23: #{tpu_custom_call.1} parent=1 // pred_check_branch
      %25 = sbr.rel (0) target = $region25
    $region24: #{tpu_custom_call.1} parent=1 // pred_region
      _
    $region25: #{tpu_custom_call.1} parent=1 // pred_fallthru
      _
    // Predicated region
    $region26: #{tpu_custom_call.1} parent=1 // pred_check
      _
    $region27: #{tpu_custom_call.1} parent=1 // pred_check_branch
      %27 = sbr.rel (0) target = $region29
    $region28: #{tpu_custom_call.1} parent=1 // pred_region
      _
    $region29: #{tpu_custom_call.1} parent=1 // pred_fallthru
      _
    %v28 = vld [vmem:[%s0] sm:$0xff]
    %v29 = vld [vmem:[%s0 + $0x8] sm:$0xff]
    %v30 = vld [vmem:[%s0 + $0x10] sm:$0xff]
    %v31 = vld [vmem:[%s0 + $0x18] sm:$0xff]
    %v32 = vld [vmem:[%s0 + $0x20] sm:$0xff]
    %v33 = vld [vmem:[%s0 + $0x28] sm:$0xff]
    %v34 = vld [vmem:[%s0 + $0x30] sm:$0xff]
    %v35 = vld [vmem:[%s0 + $0x38] sm:$0xff]
    %v36 = vld [vmem:[%s0 + $0x40] sm:$0xff]
    %v37 = vld [vmem:[%s0 + $0x48] sm:$0xff]
    %v38 = vld [vmem:[%s0 + $0x50] sm:$0xff]
    %v39 = vld [vmem:[%s0 + $0x58] sm:$0xff]
    %v40 = vld [vmem:[%s0 + $0x60] sm:$0xff]
    %v41 = vld [vmem:[%s0 + $0x68] sm:$0xff]
    %v42 = vld [vmem:[%s0 + $0x70] sm:$0xff]
    %v43 = vld [vmem:[%s0 + $0x78] sm:$0xff]
    %v44 = vld [vmem:[%s1] sm:$0xff]
    %v45 = vld [vmem:[%s1 + $0x8] sm:$0xff]
    %v46 = vld [vmem:[%s1 + $0x10] sm:$0xff]
    %v47 = vld [vmem:[%s1 + $0x18] sm:$0xff]
    %v48 = vld [vmem:[%s1 + $0x20] sm:$0xff]
    %v49 = vld [vmem:[%s1 + $0x28] sm:$0xff]
    %v50 = vld [vmem:[%s1 + $0x30] sm:$0xff]
    %v51 = vld [vmem:[%s1 + $0x38] sm:$0xff]
    %v52 = vld [vmem:[%s1 + $0x40] sm:$0xff]
    %v53 = vld [vmem:[%s1 + $0x48] sm:$0xff]
    %v54 = vld [vmem:[%s1 + $0x50] sm:$0xff]
    %v55 = vld [vmem:[%s1 + $0x58] sm:$0xff]
    %v56 = vld [vmem:[%s1 + $0x60] sm:$0xff]
    %v57 = vld [vmem:[%s1 + $0x68] sm:$0xff]
    %v58 = vld [vmem:[%s1 + $0x70] sm:$0xff]
    %v59 = vld [vmem:[%s1 + $0x78] sm:$0xff]
    %v60 = vld [vmem:[%s2] sm:$0xff]
    %v61 = vld [vmem:[%s2 + $0x8] sm:$0xff]
    %v62 = vld [vmem:[%s2 + $0x10] sm:$0xff]
    %v63 = vld [vmem:[%s2 + $0x18] sm:$0xff]
    %v64 = vld [vmem:[%s2 + $0x20] sm:$0xff]
    %v65 = vld [vmem:[%s2 + $0x28] sm:$0xff]
    %v66 = vld [vmem:[%s2 + $0x30] sm:$0xff]
    %v67 = vld [vmem:[%s2 + $0x38] sm:$0xff]
    %v68 = vld [vmem:[%s2 + $0x40] sm:$0xff]
    %v69 = vld [vmem:[%s2 + $0x48] sm:$0xff]
    %v70 = vld [vmem:[%s2 + $0x50] sm:$0xff]
    %v71 = vld [vmem:[%s2 + $0x58] sm:$0xff]
    %v72 = vld [vmem:[%s2 + $0x60] sm:$0xff]
    %v73 = vld [vmem:[%s2 + $0x68] sm:$0xff]
    %v74 = vld [vmem:[%s2 + $0x70] sm:$0xff]
    %v75 = vld [vmem:[%s2 + $0x78] sm:$0xff]
    %77 = vset.pattern.permute.xlu0 0
    %78 = vperm.xlu0 %77, %v60
    %v79 = vpop.permute.xlu0 %78
    %82 = vset.pattern.permute.xlu0 0
    %83 = vperm.xlu0 %82, %v61
    %v84 = vpop.permute.xlu0 %83
    %87 = vset.pattern.permute.xlu0 0
    %88 = vperm.xlu0 %87, %v62
    %v89 = vpop.permute.xlu0 %88
    %92 = vset.pattern.permute.xlu0 0
    %93 = vperm.xlu0 %92, %v63
    %v94 = vpop.permute.xlu0 %93
    %97 = vset.pattern.permute.xlu0 0
    %98 = vperm.xlu0 %97, %v64
    %v99 = vpop.permute.xlu0 %98
    %102 = vset.pattern.permute.xlu0 0
    %103 = vperm.xlu0 %102, %v65
    %v104 = vpop.permute.xlu0 %103
    %107 = vset.pattern.permute.xlu0 0
    %108 = vperm.xlu0 %107, %v66
    %v109 = vpop.permute.xlu0 %108
    %112 = vset.pattern.permute.xlu0 0
    %113 = vperm.xlu0 %112, %v67
    %v114 = vpop.permute.xlu0 %113
    %117 = vset.pattern.permute.xlu0 0
    %118 = vperm.xlu0 %117, %v68
    %v119 = vpop.permute.xlu0 %118
    %122 = vset.pattern.permute.xlu0 0
    %123 = vperm.xlu0 %122, %v69
    %v124 = vpop.permute.xlu0 %123
    %127 = vset.pattern.permute.xlu0 0
    %128 = vperm.xlu0 %127, %v70
    %v129 = vpop.permute.xlu0 %128
    %132 = vset.pattern.permute.xlu0 0
    %133 = vperm.xlu0 %132, %v71
    %v134 = vpop.permute.xlu0 %133
    %137 = vset.pattern.permute.xlu0 0
    %138 = vperm.xlu0 %137, %v72
    %v139 = vpop.permute.xlu0 %138
    %142 = vset.pattern.permute.xlu0 0
    %143 = vperm.xlu0 %142, %v73
    %v144 = vpop.permute.xlu0 %143
    %147 = vset.pattern.permute.xlu0 0
    %148 = vperm.xlu0 %147, %v74
    %v149 = vpop.permute.xlu0 %148
    %152 = vset.pattern.permute.xlu0 0
    %153 = vperm.xlu0 %152, %v75
    %v154 = vpop.permute.xlu0 %153
    %vm156 = vcmask 261120
    %v158 = vsel %vm156, %v44, 0
    %v161 = vsel %vm156, %v45, 0
    %v164 = vsel %vm156, %v46, 0
    %v167 = vsel %vm156, %v47, 0
    %v170 = vsel %vm156, %v48, 0
    %v173 = vsel %vm156, %v49, 0
    %v176 = vsel %vm156, %v50, 0
    %v179 = vsel %vm156, %v51, 0
    %v182 = vsel %vm156, %v52, 0
    %v185 = vsel %vm156, %v53, 0
    %v188 = vsel %vm156, %v54, 0
    %v191 = vsel %vm156, %v55, 0
    %v194 = vsel %vm156, %v56, 0
    %v197 = vsel %vm156, %v57, 0
    %v200 = vsel %vm156, %v58, 0
    %v203 = vsel %vm156, %v59, 0
    %v206 = vsel %vm156, %v28, 0
    %v209 = vsel %vm156, %v29, 0
    %v212 = vsel %vm156, %v30, 0
    %v215 = vsel %vm156, %v31, 0
    %v218 = vsel %vm156, %v32, 0
    %v221 = vsel %vm156, %v33, 0
    %v224 = vsel %vm156, %v34, 0
    %v227 = vsel %vm156, %v35, 0
    %v230 = vsel %vm156, %v36, 0
    %v233 = vsel %vm156, %v37, 0
    %v236 = vsel %vm156, %v38, 0
    %v239 = vsel %vm156, %v39, 0
    %v242 = vsel %vm156, %v40, 0
    %v245 = vsel %vm156, %v41, 0
    %v248 = vsel %vm156, %v42, 0
    %v251 = vsel %vm156, %v43, 0
    %253 = vmatpush.xpose.msra.mxu0 %v251
    %254 = vmatpush.xpose.msra.mxu0 %v248
    %255 = vmatpush.xpose.msra.mxu0 %v245
    %256 = vmatpush.xpose.msra.mxu0 %v242
    %257 = vmatpush.xpose.msra.mxu0 %v239
    %258 = vmatpush.xpose.msra.mxu0 %v236
    %259 = vmatpush.xpose.msra.mxu0 %v233
    %260 = vmatpush.xpose.msra.mxu0 %v230
    %261 = vmatpush.xpose.msra.mxu0 %v227
    %262 = vmatpush.xpose.msra.mxu0 %v224
    %263 = vmatpush.xpose.msra.mxu0 %v221
    %264 = vmatpush.xpose.msra.mxu0 %v218
    %265 = vmatpush.xpose.msra.mxu0 %v215
    %266 = vmatpush.xpose.msra.mxu0 %v212
    %267 = vmatpush.xpose.msra.mxu0 %v209
    %268 = vmatpush.xpose.msra.mxu0 %v206
    %269 = vmatmul.f32.gmra.mxu0 %v158
    %v270 = vpop.f32.mrf.mxu0
    %v271 = vadd.f32 %v79, %v270
    %272 = vmatmul.f32.gmra.mxu0 %v161
    %v273 = vpop.f32.mrf.mxu0
    %v274 = vadd.f32 %v84, %v273
    %275 = vmatmul.f32.gmra.mxu0 %v164
    %v276 = vpop.f32.mrf.mxu0
    %v277 = vadd.f32 %v89, %v276
    %278 = vmatmul.f32.gmra.mxu0 %v167
    %v279 = vpop.f32.mrf.mxu0
    %v280 = vadd.f32 %v94, %v279
    %281 = vmatmul.f32.gmra.mxu0 %v170
    %v282 = vpop.f32.mrf.mxu0
    %v283 = vadd.f32 %v99, %v282
    %284 = vmatmul.f32.gmra.mxu0 %v173
    %v285 = vpop.f32.mrf.mxu0
    %v286 = vadd.f32 %v104, %v285
    %287 = vmatmul.f32.gmra.mxu0 %v176
    %v288 = vpop.f32.mrf.mxu0
    %v289 = vadd.f32 %v109, %v288
    %290 = vmatmul.f32.gmra.mxu0 %v179
    %v291 = vpop.f32.mrf.mxu0
    %v292 = vadd.f32 %v114, %v291
    %293 = vmatmul.f32.gmra.mxu0 %v182
    %v294 = vpop.f32.mrf.mxu0
    %v295 = vadd.f32 %v119, %v294
    %296 = vmatmul.f32.gmra.mxu0 %v185
    %v297 = vpop.f32.mrf.mxu0
    %v298 = vadd.f32 %v124, %v297
    %299 = vmatmul.f32.gmra.mxu0 %v188
    %v300 = vpop.f32.mrf.mxu0
    %v301 = vadd.f32 %v129, %v300
    %302 = vmatmul.f32.gmra.mxu0 %v191
    %v303 = vpop.f32.mrf.mxu0
    %v304 = vadd.f32 %v134, %v303
    %305 = vmatmul.f32.gmra.mxu0 %v194
    %v306 = vpop.f32.mrf.mxu0
    %v307 = vadd.f32 %v139, %v306
    %308 = vmatmul.f32.gmra.mxu0 %v197
    %v309 = vpop.f32.mrf.mxu0
    %v310 = vadd.f32 %v144, %v309
    %311 = vmatmul.f32.gmra.mxu0 %v200
    %v312 = vpop.f32.mrf.mxu0
    %v313 = vadd.f32 %v149, %v312
    %314 = vmatmul.f32.gmra.mxu0 %v203
    %v315 = vpop.f32.mrf.mxu0
    %v316 = vadd.f32 %v154, %v315
    %317 = vdwg.mxu0
    %v318 = vmul.f32 %v271, 0.2
    %v319 = vmul.f32 %v274, 0.2
    %v320 = vmul.f32 %v277, 0.2
    %v321 = vmul.f32 %v280, 0.2
    %v322 = vmul.f32 %v283, 0.2
    %v323 = vmul.f32 %v286, 0.2
    %v324 = vmul.f32 %v289, 0.2
    %v325 = vmul.f32 %v292, 0.2
    %v326 = vmul.f32 %v295, 0.2
    %v327 = vmul.f32 %v298, 0.2
    %v328 = vmul.f32 %v301, 0.2
    %v329 = vmul.f32 %v304, 0.2
    %v330 = vmul.f32 %v307, 0.2
    %v331 = vmul.f32 %v310, 0.2
    %v332 = vmul.f32 %v313, 0.2
    %v333 = vmul.f32 %v316, 0.2
    %v334 = vmax.f32 %v271, %v318
    %v335 = vmax.f32 %v274, %v319
    %v336 = vmax.f32 %v277, %v320
    %v337 = vmax.f32 %v280, %v321
    %v338 = vmax.f32 %v283, %v322
    %v339 = vmax.f32 %v286, %v323
    %v340 = vmax.f32 %v289, %v324
    %v341 = vmax.f32 %v292, %v325
    %v342 = vmax.f32 %v295, %v326
    %v343 = vmax.f32 %v298, %v327
    %v344 = vmax.f32 %v301, %v328
    %v345 = vmax.f32 %v304, %v329
    %v346 = vmax.f32 %v307, %v330
    %v347 = vmax.f32 %v310, %v331
    %v348 = vmax.f32 %v313, %v332
    %v349 = vmax.f32 %v316, %v333
    %v350 = vld [vmem:[%s3] sm:$0xff]
    %v351 = vld [vmem:[%s3 + $0x8] sm:$0xff]
    %v352 = vld [vmem:[%s3 + $0x10] sm:$0xff]
    %v353 = vld [vmem:[%s3 + $0x18] sm:$0xff]
    %v354 = vld [vmem:[%s3 + $0x20] sm:$0xff]
    %v355 = vld [vmem:[%s3 + $0x28] sm:$0xff]
    %v356 = vld [vmem:[%s3 + $0x30] sm:$0xff]
    %v357 = vld [vmem:[%s3 + $0x38] sm:$0xff]
    %v358 = vld [vmem:[%s3 + $0x40] sm:$0xff]
    %v359 = vld [vmem:[%s3 + $0x48] sm:$0xff]
    %v360 = vld [vmem:[%s3 + $0x50] sm:$0xff]
    %v361 = vld [vmem:[%s3 + $0x58] sm:$0xff]
    %v362 = vld [vmem:[%s3 + $0x60] sm:$0xff]
    %v363 = vld [vmem:[%s3 + $0x68] sm:$0xff]
    %v364 = vld [vmem:[%s3 + $0x70] sm:$0xff]
    %v365 = vld [vmem:[%s3 + $0x78] sm:$0xff]
    %v366 = vld [vmem:[%s4] sm:$0xff]
    %v367 = vld [vmem:[%s4 + $0x8] sm:$0xff]
    %v368 = vld [vmem:[%s4 + $0x10] sm:$0xff]
    %v369 = vld [vmem:[%s4 + $0x18] sm:$0xff]
    %v370 = vld [vmem:[%s4 + $0x20] sm:$0xff]
    %v371 = vld [vmem:[%s4 + $0x28] sm:$0xff]
    %v372 = vld [vmem:[%s4 + $0x30] sm:$0xff]
    %v373 = vld [vmem:[%s4 + $0x38] sm:$0xff]
    %v374 = vld [vmem:[%s4 + $0x40] sm:$0xff]
    %v375 = vld [vmem:[%s4 + $0x48] sm:$0xff]
    %v376 = vld [vmem:[%s4 + $0x50] sm:$0xff]
    %v377 = vld [vmem:[%s4 + $0x58] sm:$0xff]
    %v378 = vld [vmem:[%s4 + $0x60] sm:$0xff]
    %v379 = vld [vmem:[%s4 + $0x68] sm:$0xff]
    %v380 = vld [vmem:[%s4 + $0x70] sm:$0xff]
    %v381 = vld [vmem:[%s4 + $0x78] sm:$0xff]
    %383 = vset.pattern.permute.xlu0 0
    %384 = vperm.xlu0 %383, %v366
    %v385 = vpop.permute.xlu0 %384
    %388 = vset.pattern.permute.xlu0 0
    %389 = vperm.xlu0 %388, %v367
    %v390 = vpop.permute.xlu0 %389
    %393 = vset.pattern.permute.xlu0 0
    %394 = vperm.xlu0 %393, %v368
    %v395 = vpop.permute.xlu0 %394
    %398 = vset.pattern.permute.xlu0 0
    %399 = vperm.xlu0 %398, %v369
    %v400 = vpop.permute.xlu0 %399
    %403 = vset.pattern.permute.xlu0 0
    %404 = vperm.xlu0 %403, %v370
    %v405 = vpop.permute.xlu0 %404
    %408 = vset.pattern.permute.xlu0 0
    %409 = vperm.xlu0 %408, %v371
    %v410 = vpop.permute.xlu0 %409
    %413 = vset.pattern.permute.xlu0 0
    %414 = vperm.xlu0 %413, %v372
    %v415 = vpop.permute.xlu0 %414
    %418 = vset.pattern.permute.xlu0 0
    %419 = vperm.xlu0 %418, %v373
    %v420 = vpop.permute.xlu0 %419
    %423 = vset.pattern.permute.xlu0 0
    %424 = vperm.xlu0 %423, %v374
    %v425 = vpop.permute.xlu0 %424
    %428 = vset.pattern.permute.xlu0 0
    %429 = vperm.xlu0 %428, %v375
    %v430 = vpop.permute.xlu0 %429
    %433 = vset.pattern.permute.xlu0 0
    %434 = vperm.xlu0 %433, %v376
    %v435 = vpop.permute.xlu0 %434
    %438 = vset.pattern.permute.xlu0 0
    %439 = vperm.xlu0 %438, %v377
    %v440 = vpop.permute.xlu0 %439
    %443 = vset.pattern.permute.xlu0 0
    %444 = vperm.xlu0 %443, %v378
    %v445 = vpop.permute.xlu0 %444
    %448 = vset.pattern.permute.xlu0 0
    %449 = vperm.xlu0 %448, %v379
    %v450 = vpop.permute.xlu0 %449
    %453 = vset.pattern.permute.xlu0 0
    %454 = vperm.xlu0 %453, %v380
    %v455 = vpop.permute.xlu0 %454
    %458 = vset.pattern.permute.xlu0 0
    %459 = vperm.xlu0 %458, %v381
    %v460 = vpop.permute.xlu0 %459
    %462 = vmatpush.msra.mxu0 %v349
    %463 = vmatpush.msra.mxu0 %v348
    %464 = vmatpush.msra.mxu0 %v347
    %465 = vmatpush.msra.mxu0 %v346
    %466 = vmatpush.msra.mxu0 %v345
    %467 = vmatpush.msra.mxu0 %v344
    %468 = vmatpush.msra.mxu0 %v343
    %469 = vmatpush.msra.mxu0 %v342
    %470 = vmatpush.msra.mxu0 %v341
    %471 = vmatpush.msra.mxu0 %v340
    %472 = vmatpush.msra.mxu0 %v339
    %473 = vmatpush.msra.mxu0 %v338
    %474 = vmatpush.msra.mxu0 %v337
    %475 = vmatpush.msra.mxu0 %v336
    %476 = vmatpush.msra.mxu0 %v335
    %477 = vmatpush.msra.mxu0 %v334
    %478 = vmatmul.f32.gmra.mxu0 %v350
    %v479 = vpop.f32.mrf.mxu0
    %v480 = vadd.f32 %v385, %v479
    %481 = vmatmul.f32.gmra.mxu0 %v351
    %v482 = vpop.f32.mrf.mxu0
    %v483 = vadd.f32 %v390, %v482
    %484 = vmatmul.f32.gmra.mxu0 %v352
    %v485 = vpop.f32.mrf.mxu0
    %v486 = vadd.f32 %v395, %v485
    %487 = vmatmul.f32.gmra.mxu0 %v353
    %v488 = vpop.f32.mrf.mxu0
    %v489 = vadd.f32 %v400, %v488
    %490 = vmatmul.f32.gmra.mxu0 %v354
    %v491 = vpop.f32.mrf.mxu0
    %v492 = vadd.f32 %v405, %v491
    %493 = vmatmul.f32.gmra.mxu0 %v355
    %v494 = vpop.f32.mrf.mxu0
    %v495 = vadd.f32 %v410, %v494
    %496 = vmatmul.f32.gmra.mxu0 %v356
    %v497 = vpop.f32.mrf.mxu0
    %v498 = vadd.f32 %v415, %v497
    %499 = vmatmul.f32.gmra.mxu0 %v357
    %v500 = vpop.f32.mrf.mxu0
    %v501 = vadd.f32 %v420, %v500
    %502 = vmatmul.f32.gmra.mxu0 %v358
    %v503 = vpop.f32.mrf.mxu0
    %v504 = vadd.f32 %v425, %v503
    %505 = vmatmul.f32.gmra.mxu0 %v359
    %v506 = vpop.f32.mrf.mxu0
    %v507 = vadd.f32 %v430, %v506
    %508 = vmatmul.f32.gmra.mxu0 %v360
    %v509 = vpop.f32.mrf.mxu0
    %v510 = vadd.f32 %v435, %v509
    %511 = vmatmul.f32.gmra.mxu0 %v361
    %v512 = vpop.f32.mrf.mxu0
    %v513 = vadd.f32 %v440, %v512
    %514 = vmatmul.f32.gmra.mxu0 %v362
    %v515 = vpop.f32.mrf.mxu0
    %v516 = vadd.f32 %v445, %v515
    %517 = vmatmul.f32.gmra.mxu0 %v363
    %v518 = vpop.f32.mrf.mxu0
    %v519 = vadd.f32 %v450, %v518
    %520 = vmatmul.f32.gmra.mxu0 %v364
    %v521 = vpop.f32.mrf.mxu0
    %v522 = vadd.f32 %v455, %v521
    %523 = vmatmul.f32.gmra.mxu0 %v365
    %v524 = vpop.f32.mrf.mxu0
    %v525 = vadd.f32 %v460, %v524
    %526 = vdwg.mxu0
    %v527 = vmul.f32 %v480, 0.2
    %v528 = vmul.f32 %v483, 0.2
    %v529 = vmul.f32 %v486, 0.2
    %v530 = vmul.f32 %v489, 0.2
    %v531 = vmul.f32 %v492, 0.2
    %v532 = vmul.f32 %v495, 0.2
    %v533 = vmul.f32 %v498, 0.2
    %v534 = vmul.f32 %v501, 0.2
    %v535 = vmul.f32 %v504, 0.2
    %v536 = vmul.f32 %v507, 0.2
    %v537 = vmul.f32 %v510, 0.2
    %v538 = vmul.f32 %v513, 0.2
    %v539 = vmul.f32 %v516, 0.2
    %v540 = vmul.f32 %v519, 0.2
    %v541 = vmul.f32 %v522, 0.2
    %v542 = vmul.f32 %v525, 0.2
    %v543 = vmax.f32 %v480, %v527
    %v544 = vmax.f32 %v483, %v528
    %v545 = vmax.f32 %v486, %v529
    %v546 = vmax.f32 %v489, %v530
    %v547 = vmax.f32 %v492, %v531
    %v548 = vmax.f32 %v495, %v532
    %v549 = vmax.f32 %v498, %v533
    %v550 = vmax.f32 %v501, %v534
    %v551 = vmax.f32 %v504, %v535
    %v552 = vmax.f32 %v507, %v536
    %v553 = vmax.f32 %v510, %v537
    %v554 = vmax.f32 %v513, %v538
    %v555 = vmax.f32 %v516, %v539
    %v556 = vmax.f32 %v519, %v540
    %v557 = vmax.f32 %v522, %v541
    %v558 = vmax.f32 %v525, %v542
    %v559 = vld [vmem:[%s5] sm:$0xff]
    %v560 = vld [vmem:[%s5 + $0x8] sm:$0xff]
    %v561 = vld [vmem:[%s5 + $0x10] sm:$0xff]
    %v562 = vld [vmem:[%s5 + $0x18] sm:$0xff]
    %v563 = vld [vmem:[%s5 + $0x20] sm:$0xff]
    %v564 = vld [vmem:[%s5 + $0x28] sm:$0xff]
    %v565 = vld [vmem:[%s5 + $0x30] sm:$0xff]
    %v566 = vld [vmem:[%s5 + $0x38] sm:$0xff]
    %v567 = vld [vmem:[%s5 + $0x40] sm:$0xff]
    %v568 = vld [vmem:[%s5 + $0x48] sm:$0xff]
    %v569 = vld [vmem:[%s5 + $0x50] sm:$0xff]
    %v570 = vld [vmem:[%s5 + $0x58] sm:$0xff]
    %v571 = vld [vmem:[%s5 + $0x60] sm:$0xff]
    %v572 = vld [vmem:[%s5 + $0x68] sm:$0xff]
    %v573 = vld [vmem:[%s5 + $0x70] sm:$0xff]
    %v574 = vld [vmem:[%s5 + $0x78] sm:$0xff]
    %576 = vset.pattern.permute.xlu0 0
    %577 = vperm.xlu0 %576, %v559
    %v578 = vpop.permute.xlu0 %577
    %581 = vset.pattern.permute.xlu0 0
    %582 = vperm.xlu0 %581, %v560
    %v583 = vpop.permute.xlu0 %582
    %586 = vset.pattern.permute.xlu0 0
    %587 = vperm.xlu0 %586, %v561
    %v588 = vpop.permute.xlu0 %587
    %591 = vset.pattern.permute.xlu0 0
    %592 = vperm.xlu0 %591, %v562
    %v593 = vpop.permute.xlu0 %592
    %596 = vset.pattern.permute.xlu0 0
    %597 = vperm.xlu0 %596, %v563
    %v598 = vpop.permute.xlu0 %597
    %601 = vset.pattern.permute.xlu0 0
    %602 = vperm.xlu0 %601, %v564
    %v603 = vpop.permute.xlu0 %602
    %606 = vset.pattern.permute.xlu0 0
    %607 = vperm.xlu0 %606, %v565
    %v608 = vpop.permute.xlu0 %607
    %611 = vset.pattern.permute.xlu0 0
    %612 = vperm.xlu0 %611, %v566
    %v613 = vpop.permute.xlu0 %612
    %616 = vset.pattern.permute.xlu0 0
    %617 = vperm.xlu0 %616, %v567
    %v618 = vpop.permute.xlu0 %617
    %621 = vset.pattern.permute.xlu0 0
    %622 = vperm.xlu0 %621, %v568
    %v623 = vpop.permute.xlu0 %622
    %626 = vset.pattern.permute.xlu0 0
    %627 = vperm.xlu0 %626, %v569
    %v628 = vpop.permute.xlu0 %627
    %631 = vset.pattern.permute.xlu0 0
    %632 = vperm.xlu0 %631, %v570
    %v633 = vpop.permute.xlu0 %632
    %636 = vset.pattern.permute.xlu0 0
    %637 = vperm.xlu0 %636, %v571
    %v638 = vpop.permute.xlu0 %637
    %641 = vset.pattern.permute.xlu0 0
    %642 = vperm.xlu0 %641, %v572
    %v643 = vpop.permute.xlu0 %642
    %646 = vset.pattern.permute.xlu0 0
    %647 = vperm.xlu0 %646, %v573
    %v648 = vpop.permute.xlu0 %647
    %651 = vset.pattern.permute.xlu0 0
    %652 = vperm.xlu0 %651, %v574
    %v653 = vpop.permute.xlu0 %652
    %v655 = vmul.f32 %v543, %v578
    %v656 = vmul.f32 %v544, %v583
    %v657 = vmul.f32 %v545, %v588
    %v658 = vmul.f32 %v546, %v593
    %v659 = vmul.f32 %v547, %v598
    %v660 = vmul.f32 %v548, %v603
    %v661 = vmul.f32 %v549, %v608
    %v662 = vmul.f32 %v550, %v613
    %v663 = vmul.f32 %v551, %v618
    %v664 = vmul.f32 %v552, %v623
    %v665 = vmul.f32 %v553, %v628
    %v666 = vmul.f32 %v554, %v633
    %v667 = vmul.f32 %v555, %v638
    %v668 = vmul.f32 %v556, %v643
    %v669 = vmul.f32 %v557, %v648
    %v670 = vmul.f32 %v558, %v653
    %v671 = vadd.f32 %v655, %v656
    %v672 = vadd.f32 %v671, %v657
    %v673 = vadd.f32 %v672, %v658
    %v674 = vadd.f32 %v673, %v659
    %v675 = vadd.f32 %v674, %v660
    %v676 = vadd.f32 %v675, %v661
    %v677 = vadd.f32 %v676, %v662
    %v678 = vadd.f32 %v677, %v663
    %v679 = vadd.f32 %v678, %v664
    %v680 = vadd.f32 %v679, %v665
    %v681 = vadd.f32 %v680, %v666
    %v682 = vadd.f32 %v681, %v667
    %v683 = vadd.f32 %v682, %v668
    %v684 = vadd.f32 %v683, %v669
    %v685 = vadd.f32 %v684, %v670
    %v686 = vrot.slane %v685, 4
    %v687 = vadd.f32 %v685, %v686
    %v688 = vrot.slane %v687, 2
    %v689 = vadd.f32 %v687, %v688
    %v690 = vrot.slane %v689, 1
    %v691 = vadd.f32 %v689, %v690
    %s692 = sld [smem:[#allocation2]]
    %v693 = vstv %s692
    %v694 = vadd.f32 %v691, %v693
    %v695 = vsub.f32 0.0, %v694
    %v696 = vmul.f32 %v695, 1.442695
    %v697 = vpow.pop %v696
    %v698 = vadd.f32 %v697, 1.0
    %v699 = vrcp.pop %v698
    %v700 = vmul.f32 %v698, %v699
    %v701 = vsub.f32 1.0, %v700
    %v702 = vmul.f32 %v699, %v701
    %v703 = vadd.f32 %v699, %v702
    %vm704 = vweird.f32 %v698
    %vm705 = vweird.f32 %v699
    %vm706 = vmor %vm704, %vm705
    %v707 = vsel %vm706, %v699, %v703
    %v708 = vand.u32 2147483647, %v698
    %vm709 = vcmp.eq.f32.partialorder %v708, 8.507059e+37
    %v710 = vand.u32 %v698, 2147483648
    %v711 = vor.u32 1.1754944e-38, %v710
    %v712 = vsel %vm709, %v711, %v707
    %v713 = vmul.f32 1.0, %v712
    %714 = vst [vmem:[#allocation3] sm:$0x1] %v713
    // Predicated region
    $region30: #{tpu_custom_call.1} parent=1 // pred_check
      _
    $region31: #{tpu_custom_call.1} parent=1 // pred_check_branch
      %716 = sbr.rel (0) target = $region33
    $region32: #{tpu_custom_call.1} parent=1 // pred_region
      %718 = vsyncadd [#allocation4], 0
      %s720 = sshll.u32 [#allocation3], 4
      %s721 = int_to_ptr.vmem [resolvable:$true] %s720
      %s722 = sshll.u32 %s7, 4
      %s723 = int_to_ptr.hbm [resolvable:$true] %s722
      %725 = dma.vmem_to_hbm [thread:$0]  %s721, 16, %s723, [#allocation4]
    $region33: #{tpu_custom_call.1} parent=1 // pred_fallthru
      _
    // Predicated region
    $region34: #{tpu_custom_call.1} parent=1 // pred_check
      _
    $region35: #{tpu_custom_call.1} parent=1 // pred_check_branch
      %727 = sbr.rel (0) target = $region37
    $region36: #{tpu_custom_call.1} parent=1 // pred_region
      %729 = dma.done [#allocation4], 16
    $region37: #{tpu_custom_call.1} parent=1 // pred_fallthru
      _
    %730 = vsyncpa [#allocation4], 1

</llo_original>
